<compile_context>
chip_gen: v6e
topology: v6e:2x2x1
jax: 0.10.0
libtpu: 0.0.40
codegen_flags: <defaults>
</compile_context>

<pallas_src>
import functools

import jax
import jax.numpy as jnp
from jax.experimental import pallas as pl
from jax.experimental.pallas import tpu as pltpu


def _round_up(x: int, m: int) -> int:
    return ((x + m - 1) // m) * m


def _unembed_kernel(x_ref, w_ref, b_ref, o_ref):
    # x_ref: (tm, K)  w_ref: (K, tn)  b_ref: (1, tn)  o_ref: (tm, tn)
    acc = jnp.dot(x_ref[...], w_ref[...], preferred_element_type=jnp.float32)
    o_ref[...] = (acc + b_ref[...].astype(jnp.float32)).astype(o_ref.dtype)


@functools.partial(jax.jit, static_argnames=("tm", "tn", "compute_dtype"))
def unembed(x, W_U, b_U, *, tm=None, tn=None, compute_dtype=None):
    """x: (batch, posn, d_model), W_U: (d_model, d_vocab), b_U: (d_vocab,).

    Returns logits of shape (batch, posn, d_vocab), dtype of x.
    """
    batch, posn, d_model = x.shape
    K, d_vocab = W_U.shape
    assert K == d_model

    out_dtype = x.dtype
    if compute_dtype is not None:
        x = x.astype(compute_dtype)
        W_U = W_U.astype(compute_dtype)
    itemsize = jnp.dtype(x.dtype).itemsize

    M = batch * posn
    x2 = x.reshape(M, d_model)

    # ---- Row (M) tiling: keep x fully resident as a single row tile when it
    #      is small (then it is DMA'd from HBM exactly once); otherwise use
    #      MXU-friendly 256-row tiles (v6e/v7x 256x256 MXU), 128 as fallback.
    if tm is None:
        m8 = _round_up(M, 8)
        if m8 * K * itemsize <= 2 * 1024 * 1024:
            tm = m8
        elif M % 256 == 0:
            tm = 256
        else:
            tm = 128 if M % 128 == 0 else 256
    Mp = _round_up(M, tm)

    # ---- Vocab (N) tiling: largest lane-dense tile whose double-buffered
    #      working set fits a conservative cross-generation VMEM budget.
    budget = 20 * 1024 * 1024
    if tn is None:
        tn = 128
        for cand in (2048, 1024, 512, 256, 128):
            per_step = 2 * (tm * K + K * cand + tm * cand + cand) * itemsize
            if per_step <= budget:
                tn = cand
                break
        tn = min(tn, _round_up(d_vocab, 128))
    Vp = _round_up(d_vocab, tn)

    # ---- Zero-pad to tile multiples; padded rows/cols are sliced off below.
    if Mp != M:
        x2 = jnp.pad(x2, ((0, Mp - M), (0, 0)))
    if Vp != d_vocab:
        W_U = jnp.pad(W_U, ((0, 0), (0, Vp - d_vocab)))
        b_U = jnp.pad(b_U, (0, Vp - d_vocab))
    b2 = b_U.reshape(1, Vp)

    grid = (Vp // tn, Mp // tm)  # vocab OUTER (megacore-sharded), M INNER

    per_step = 2 * (tm * K + K * tn + tm * tn + tn) * itemsize
    vmem_limit = min(48 * 1024 * 1024,
                     max(int(per_step * 3 // 2) + (4 << 20), 16 << 20))

    cost = pl.CostEstimate(
        flops=2 * Mp * K * Vp,
        transcendentals=0,
        bytes_accessed=(Mp * K + K * Vp + Vp) * itemsize
        + Mp * Vp * jnp.dtype(out_dtype).itemsize,
    )

    out2 = pl.pallas_call(
        _unembed_kernel,
        out_shape=jax.ShapeDtypeStruct((Mp, Vp), out_dtype),
        grid_spec=pltpu.PrefetchScalarGridSpec(
            num_scalar_prefetch=0,
            grid=grid,
            in_specs=[
                # activations: re-used block index over the outer vocab axis
                pl.BlockSpec((tm, K), lambda j, i: (i, 0)),
                # W_U column tile: constant over the inner M sweep -> loaded once
                pl.BlockSpec((K, tn), lambda j, i: (0, j)),
                # bias column tile
                pl.BlockSpec((1, tn), lambda j, i: (0, j)),
            ],
            out_specs=pl.BlockSpec((tm, tn), lambda j, i: (i, j)),
        ),
        compiler_params=pltpu.CompilerParams(
            dimension_semantics=("parallel", "arbitrary"),
            vmem_limit_bytes=vmem_limit,
        ),
        cost_estimate=cost,
    )(x2, W_U, b2)

    out2 = out2[:M, :d_vocab]
    return out2.reshape(batch, posn, d_vocab)


if __name__ == "__main__":
    init_range = 0.02
    key = jax.random.PRNGKey(0)

    # --- Test 1: shapes consistent with the module (batch=2, posn=8,
    #             d_model=32, d_vocab=128) — exact tile fit.
    batch, posn, d_model, d_vocab = 2, 8, 32, 128
    k1, k2, k3, k4 = jax.random.split(key, 4)
    x = jax.random.normal(k1, (batch, posn, d_model), dtype=jnp.float32)
    W_U = init_range * jax.random.normal(k2, (d_model, d_vocab), dtype=jnp.float32)
    b_U = jnp.zeros((d_vocab,), dtype=jnp.float32)

    logits = jax.block_until_ready(unembed(x, W_U, b_U))
    ref = jnp.einsum("bpd,dv->bpv", x, W_U) + b_U
    assert logits.shape == (batch, posn, d_vocab)
    assert jnp.allclose(logits, ref, atol=1e-5, rtol=1e-5)

    # --- Test 2: non-aligned shapes (exercises the padding path):
    #             posn=7 -> M=14 (pads to 16), d_vocab=100 (pads to 128).
    batch2, posn2, d_vocab2 = 2, 7, 100
    x2 = jax.random.normal(k3, (batch2, posn2, d_model), dtype=jnp.float32)
    W2 = init_range * jax.random.normal(k4, (d_model, d_vocab2), dtype=jnp.float32)
    b2 = jnp.zeros((d_vocab2,), dtype=jnp.float32)

    logits2 = jax.block_until_ready(unembed(x2, W2, b2))
    ref2 = jnp.einsum("bpd,dv->bpv", x2, W2) + b2
    assert logits2.shape == (batch2, posn2, d_vocab2)
    assert jnp.allclose(logits2, ref2, atol=1e-5, rtol=1e-5)

    print("KERNEL_OK")
</pallas_src>

<mosaic_0001>
module attributes {stable_mosaic.version = 11 : i64} {
  func.func @_unembed_kernel(%arg0: i32, %arg1: i32, %arg2: memref<16x32xf32, #tpu.memory_space<vmem>>, %arg3: memref<32x128xf32, #tpu.memory_space<vmem>>, %arg4: memref<1x128xf32, #tpu.memory_space<vmem>>, %arg5: memref<16x128xf32, #tpu.memory_space<vmem>>) attributes {dimension_semantics = [#tpu.dimension_semantics<parallel>, #tpu.dimension_semantics<arbitrary>], iteration_bounds = array<i64: 1, 1>, scalar_prefetch = 0 : i64, scratch_operands = 0 : i64, tpu.core_type = #tpu.core_type<tc>, window_params = [{transform_indices = @transform_0, window_bounds = array<i64: 16, 32>}, {transform_indices = @transform_1, window_bounds = array<i64: 32, 128>}, {transform_indices = @transform_2, window_bounds = array<i64: 1, 128>}, {transform_indices = @transform_3, window_bounds = array<i64: 16, 128>}]} {
    %c0 = arith.constant 0 : index
    %c0_0 = arith.constant 0 : index
    %0 = vector.load %arg2[%c0, %c0_0] : memref<16x32xf32, #tpu.memory_space<vmem>>, vector<16x32xf32>
    %c0_1 = arith.constant 0 : index
    %c0_2 = arith.constant 0 : index
    %1 = vector.load %arg3[%c0_1, %c0_2] : memref<32x128xf32, #tpu.memory_space<vmem>>, vector<32x128xf32>
    %cst = arith.constant dense<0.000000e+00> : vector<16x128xf32>
    %2 = tpu.matmul %0, %1, %cst {dimension_numbers = #tpu.dot_dimension_numbers<[1], [0], [0], [1], [0, 0, 1, 1], [], []>} : vector<16x32xf32>, vector<32x128xf32>, vector<16x128xf32> -> vector<16x128xf32>
    %c0_3 = arith.constant 0 : index
    %c0_4 = arith.constant 0 : index
    %3 = vector.load %arg4[%c0_3, %c0_4] : memref<1x128xf32, #tpu.memory_space<vmem>>, vector<1x128xf32>
    %4 = vector.broadcast %3 : vector<1x128xf32> to vector<16x128xf32>
    %5 = arith.addf %2, %4 : vector<16x128xf32>
    %c0_5 = arith.constant 0 : index
    %c0_6 = arith.constant 0 : index
    %6 = vector.load %arg5[%c0_5, %c0_6] : memref<16x128xf32, #tpu.memory_space<vmem>>, vector<16x128xf32>
    tpu.vector_store %arg5[%c0_5, %c0_6], %5 {strides = array<i32>} : memref<16x128xf32, #tpu.memory_space<vmem>>, vector<16x128xf32>,
    return
  }
  func.func @transform_0(%arg0: i32, %arg1: i32) -> (i32, i32) {
    %c0_i32 = arith.constant 0 : i32
    %c0_i32_0 = arith.constant 0 : i32
    return %arg1, %c0_i32 : i32, i32
  }
  func.func @transform_1(%arg0: i32, %arg1: i32) -> (i32, i32) {
    %c0_i32 = arith.constant 0 : i32
    %c0_i32_0 = arith.constant 0 : i32
    return %c0_i32, %arg0 : i32, i32
  }
  func.func @transform_2(%arg0: i32, %arg1: i32) -> (i32, i32) {
    %c0_i32 = arith.constant 0 : i32
    %c0_i32_0 = arith.constant 0 : i32
    return %c0_i32, %arg0 : i32, i32
  }
  func.func @transform_3(%arg0: i32, %arg1: i32) -> (i32, i32) {
    %c0_i32 = arith.constant 0 : i32
    return %arg1, %arg0 : i32, i32
  }
}

</mosaic_0001>

<llo_original>
// kernel: unembed.1
$region0: #{unembed.1}
  #allocation0 [shape = 'u32[]', space=smem, size = 0x4, offset = 0x4, fixed_abs, tag = 'smem constant byte address 0x4 - core index']
  #allocation1 [shape = 'u32[144,128]{1,0:T(1,128)}', space=vmem, size = 0x12000, scoped, tag = 'internal scratch']
  %s0 = inlined_call_operand.hbm [shape: f32[16,32], index: 0, kind: input, shape index: {}]
  %s1 = inlined_call_operand.hbm [shape: f32[32,128], index: 1, kind: input, shape index: {}]
  %s2 = inlined_call_operand.vmem [shape: f32[1,128], index: 2, kind: input, shape index: {}]
  %s3 = inlined_call_operand.hbm [shape: f32[16,128], index: 3, kind: output, shape index: {}]
  %s4 = sld [smem:[#allocation0]]
  $region30: #{unembed.1} parent=0
    _
  %s6 = ssub.s32 1, %s4
  %s7 = scalar_select 0, %s6, %s4
  $region1: #{unembed.1} parent=0
    #allocation2 [shape = 'u8[8192]{0}', space=vmem, size = 0x2000, scoped, tag = 'input window, operand 0, single buffered']
    #allocation3 [shape = 's32[1]{0}', space=sflag, size = 0x4, scoped, tag = 'scoped memory for unembed.1']
    #allocation4 [shape = 's32[1]{0}', space=sflag, size = 0x4, scoped, tag = 'scoped memory for unembed.1']
    #allocation5 [shape = 'u8[16384]{0}', space=vmem, size = 0x4000, scoped, tag = 'input window, operand 1, single buffered']
    #allocation6 [shape = 's32[1]{0}', space=sflag, size = 0x4, scoped, tag = 'scoped memory for unembed.1']
    #allocation7 [shape = 'u8[8192]{0}', space=vmem, size = 0x2000, scoped, tag = 'output window, operand 0, single buffered']
    %8 = vsyncpa [#allocation3], 0
    %9 = vsyncpa [#allocation6], 0
    %10 = vsyncpa [#allocation4], 0
    // Predicated region
    $region2: #{unembed.1} parent=1 // pred_check
      _
    $region3: #{unembed.1} parent=1 // pred_check_branch
      %12 = sbr.rel (0) target = $region5
    $region4: #{unembed.1} parent=1 // pred_region
      %s14 = ssub.s32 256, 256
      %15 = vsyncadd [#allocation3], %s14
      %s16 = sshll.u32 [#allocation2], 4
      %s17 = int_to_ptr.vmem [resolvable:$true] %s16
      %22 = dma.hbm_to_vmem [thread:$0]  %s0, 256, %s17, [#allocation3], 128, 128, 8
    $region5: #{unembed.1} parent=1 // pred_fallthru
      _
    // Predicated region
    $region6: #{unembed.1} parent=1 // pred_check
      _
    $region7: #{unembed.1} parent=1 // pred_check_branch
      %24 = sbr.rel (0) target = $region9
    $region8: #{unembed.1} parent=1 // pred_region
      %s26 = ssub.s32 512, 512
      %27 = vsyncadd [#allocation6], %s26
      %s28 = sshll.u32 [#allocation5], 4
      %s29 = int_to_ptr.vmem [resolvable:$true] %s28
      %34 = dma.hbm_to_vmem [thread:$0]  %s1, 512, %s29, [#allocation6], 128, 128, 8
    $region9: #{unembed.1} parent=1 // pred_fallthru
      _
    // Predicated region
    $region10: #{unembed.1} parent=1 // pred_check
      _
    $region11: #{unembed.1} parent=1 // pred_check_branch
      %36 = sbr.rel (0) target = $region13
    $region12: #{unembed.1} parent=1 // pred_region
      _
    $region13: #{unembed.1} parent=1 // pred_fallthru
      _
    // Predicated region
    $region14: #{unembed.1} parent=1 // pred_check
      _
    $region15: #{unembed.1} parent=1 // pred_check_branch
      %38 = sbr.rel (0) target = $region17
    $region16: #{unembed.1} parent=1 // pred_region
      %39 = dma.done [#allocation3], 256
    $region17: #{unembed.1} parent=1 // pred_fallthru
      _
    // Predicated region
    $region18: #{unembed.1} parent=1 // pred_check
      _
    $region19: #{unembed.1} parent=1 // pred_check_branch
      %41 = sbr.rel (0) target = $region21
    $region20: #{unembed.1} parent=1 // pred_region
      %42 = dma.done [#allocation6], 512
    $region21: #{unembed.1} parent=1 // pred_fallthru
      _
    %v43 = vld [vmem:[#allocation2] sm:$0xff]
    %v44 = vld [vmem:[#allocation2 + $0x8] sm:$0xff]
    %v45 = vld [vmem:[#allocation5] sm:$0xff]
    %v46 = vld [vmem:[#allocation5 + $0x8] sm:$0xff]
    %v47 = vld [vmem:[#allocation5 + $0x10] sm:$0xff]
    %v48 = vld [vmem:[#allocation5 + $0x18] sm:$0xff]
    %v49 = vld [vmem:[%s2] sm:$0x1]
    %v51 = vlaneseq
    %v52 = vshrl.u32 %v51, 7
    %v53 = vsub.s32 0, %v52
    %v54 = vrot.slane %v49, %v53
    %vm56 = vcmask 261120
    %v58 = vsel %vm56, %v43, 0
    %v61 = vsel %vm56, %v44, 0
    %63 = vmatprep.subr.mxu0 0.0
    %64 = vmatpush1.msra.mxu0 0.0
    %65 = vmatprep.subr.mxu0 0.0
    %66 = vmatpush1.msra.mxu0 0.0
    %67 = vmatprep.subr.mxu0 0.0
    %68 = vmatpush1.msra.mxu0 0.0
    %69 = vmatprep.subr.mxu0 0.0
    %70 = vmatpush1.msra.mxu0 0.0
    %71 = vmatprep.subr.mxu0 0.0
    %72 = vmatpush1.msra.mxu0 0.0
    %73 = vmatprep.subr.mxu0 0.0
    %74 = vmatpush1.msra.mxu0 0.0
    %75 = vmatprep.subr.mxu0 0.0
    %76 = vmatpush1.msra.mxu0 0.0
    %77 = vmatprep.subr.mxu0 0.0
    %78 = vmatpush1.msra.mxu0 0.0
    %79 = vmatprep.subr.mxu0 0.0
    %80 = vmatpush1.msra.mxu0 0.0
    %81 = vmatprep.subr.mxu0 0.0
    %82 = vmatpush1.msra.mxu0 0.0
    %83 = vmatprep.subr.mxu0 0.0
    %84 = vmatpush1.msra.mxu0 0.0
    %85 = vmatprep.subr.mxu0 0.0
    %86 = vmatpush1.msra.mxu0 0.0
    %87 = vmatprep.subr.mxu0 0.0
    %88 = vmatpush1.msra.mxu0 %v48
    %89 = vmatprep.subr.mxu0 0.0
    %90 = vmatpush1.msra.mxu0 %v47
    %91 = vmatprep.subr.mxu0 0.0
    %92 = vmatpush1.msra.mxu0 %v46
    %93 = vmatprep.subr.mxu0 0.0
    %94 = vmatpush1.msra.mxu0 %v45
    %95 = vmatprep.subr.mxu0 0.0
    %96 = vmatpush2.msra.mxu0 0.0
    %97 = vmatprep.subr.mxu0 0.0
    %98 = vmatpush2.msra.mxu0 0.0
    %99 = vmatprep.subr.mxu0 0.0
    %100 = vmatpush2.msra.mxu0 0.0
    %101 = vmatprep.subr.mxu0 0.0
    %102 = vmatpush2.msra.mxu0 0.0
    %103 = vmatprep.subr.mxu0 0.0
    %104 = vmatpush2.msra.mxu0 0.0
    %105 = vmatprep.subr.mxu0 0.0
    %106 = vmatpush2.msra.mxu0 0.0
    %107 = vmatprep.subr.mxu0 0.0
    %108 = vmatpush2.msra.mxu0 0.0
    %109 = vmatprep.subr.mxu0 0.0
    %110 = vmatpush2.msra.mxu0 0.0
    %111 = vmatprep.subr.mxu0 0.0
    %112 = vmatpush2.msra.mxu0 0.0
    %113 = vmatprep.subr.mxu0 0.0
    %114 = vmatpush2.msra.mxu0 0.0
    %115 = vmatprep.subr.mxu0 0.0
    %116 = vmatpush2.msra.mxu0 0.0
    %117 = vmatprep.subr.mxu0 0.0
    %118 = vmatpush2.msra.mxu0 0.0
    %119 = vmatprep.subr.mxu0 0.0
    %120 = vmatpush2.msra.mxu0 0.0
    %121 = vmatprep.subr.mxu0 0.0
    %122 = vmatpush2.msra.mxu0 0.0
    %123 = vmatprep.subr.mxu0 0.0
    %124 = vmatpush2.msra.mxu0 0.0
    %125 = vmatprep.subr.mxu0 0.0
    %126 = vmatpush2.msra.mxu0 0.0
    %127 = vmatprep.mubr.f32.mxu0 0.0
    %128 = vmatmul.mubr.f32.gmra.mxu0 %v58
    %v129 = vpop.f32.mrf.mxu0
    %v130 = vadd.f32 %v54, %v129
    %v131 = vpop.f32.mrf.mxu0
    %132 = vmatprep.mubr.f32.mxu0 0.0
    %133 = vmatmul.mubr.f32.gmra.mxu0 %v61
    %v134 = vpop.f32.mrf.mxu0
    %v135 = vadd.f32 %v54, %v134
    %v136 = vpop.f32.mrf.mxu0
    %137 = vdwg.mxu0
    %138 = vst [vmem:[#allocation7] sm:$0xff] %v130
    %139 = vst [vmem:[#allocation7 + $0x8] sm:$0xff] %v135
    // Predicated region
    $region22: #{unembed.1} parent=1 // pred_check
      _
    $region23: #{unembed.1} parent=1 // pred_check_branch
      %141 = sbr.rel (0) target = $region25
    $region24: #{unembed.1} parent=1 // pred_region
      %s143 = ssub.s32 256, 256
      %144 = vsyncadd [#allocation4], %s143
      %s145 = sshll.u32 [#allocation7], 4
      %s146 = int_to_ptr.vmem [resolvable:$true] %s145
      %151 = dma.vmem_to_hbm [thread:$0]  %s146, 256, %s3, [#allocation4], 128, 128, 8
    $region25: #{unembed.1} parent=1 // pred_fallthru
      _
    // Predicated region
    $region26: #{unembed.1} parent=1 // pred_check
      _
    $region27: #{unembed.1} parent=1 // pred_check_branch
      %153 = sbr.rel (0) target = $region29
    $region28: #{unembed.1} parent=1 // pred_region
      %154 = dma.done [#allocation4], 256
    $region29: #{unembed.1} parent=1 // pred_fallthru
      _
    %155 = vsyncpa [#allocation3], 1
    %156 = vsyncpa [#allocation6], 1
    %157 = vsyncpa [#allocation4], 1

</llo_original>
